<compile_context>
chip_gen: v6e
topology: v6e:2x2x1
jax: 0.10.0
libtpu: 0.0.40
codegen_flags: <defaults>
</compile_context>

<pallas_src>
import jax
import jax.numpy as jnp
from jax.experimental import pallas as pl
from jax.experimental.pallas import tpu as pltpu


def _round_up(x, m):
    return (x + m - 1) // m * m


def _make_kernel(seg_len):
    """seg_len = per-batch-element spatial length L (segment size on lanes)."""

    def kernel(x_ref, w1_ref, w2_ref, o_ref):
        # x_ref : (Cp_in,  W)  with W = seg_per_tile * L (batch segments on lanes)
        # w1_ref: (Cp_out, 3*Cp_in  + 8)  -- tap groups [k0 | k1 | k2 | bias]
        # w2_ref: (Cp_out, 3*Cp_out + 8)
        # o_ref : (Cp_out, W)
        w = x_ref.shape[1]

        # Boundary masks, computed ONCE per grid step (not per batch element).
        col = jax.lax.broadcasted_iota(jnp.int32, (1, w), 1)
        pos = col % seg_len
        left_mask = (pos != 0).astype(jnp.float32)            # l-1 exists
        right_mask = (pos != seg_len - 1).astype(jnp.float32)  # l+1 exists
        # Bias tap group: row 0 = ones, rows 1..7 = zeros (8-row aligned).
        bias_grp = (jax.lax.broadcasted_iota(jnp.int32, (8, w), 0)
                    == 0).astype(jnp.float32)

        def taps(v):
            # v: (Cp, W) -> (3*Cp + 8, W), rows = [v[l-1] | v[l] | v[l+1] | 1;0..]
            # p=1 zero-padding via roll + mask-multiply. Segment (and tile)
            # boundaries coincide with roll wrap-around and are masked to 0.
            left = pltpu.roll(v, shift=1, axis=1) * left_mask
            right = pltpu.roll(v, shift=w - 1, axis=1) * right_mask
            return jnp.concatenate([left, v, right, bias_grp], axis=0)

        x = x_ref[...]
        h = jnp.maximum(
            jnp.dot(w1_ref[...], taps(x), preferred_element_type=jnp.float32),
            0.0)
        y = jnp.maximum(
            jnp.dot(w2_ref[...], taps(h), preferred_element_type=jnp.float32),
            0.0)
        o_ref[...] = y.astype(o_ref.dtype)

    return kernel


def _augment_weight(w, b, cp_src, cp_dst):
    """PyTorch Conv1d weight (C_dst, C_src, 3) + bias (C_dst,) ->
    (cp_dst, 3*cp_src + 8): taps stacked on the contraction axis, each tap
    group zero-padded to cp_src rows, plus an 8-wide bias column group."""
    c_dst, c_src, _ = w.shape
    out = jnp.zeros((cp_dst, 3 * cp_src + 8), jnp.float32)
    for k in range(3):
        out = out.at[:c_dst, k * cp_src:k * cp_src + c_src].set(
            w[:, :, k].astype(jnp.float32))
    out = out.at[:c_dst, 3 * cp_src].set(b.astype(jnp.float32))
    return out


def _pick_seg_per_tile(n, length, per_seg_bytes, budget=12 << 20):
    """Choose how many batch segments to fuse per grid step."""
    divs = [d for d in range(1, n + 1) if n % d == 0]
    # Lane alignment: block width must be a multiple of 128 unless untiled.
    aligned = [d for d in divs if (d * length) % 128 == 0] or [n]
    fits = [d for d in aligned if d * per_seg_bytes <= budget] or [min(aligned)]
    # Prefer >=4 grid steps (v7x 2 TCs, double-buffering per TC), else >=2
    # (pipelining), else 1; within each class take the largest block.
    for min_steps in (4, 2, 1):
        cand = [d for d in fits if n // d >= min_steps]
        if cand:
            return max(cand)
    return max(fits)


def conv_block_pallas(x_ncl, w1, b1, w2, b2, *, seg_per_tile=None):
    """ConvBlock forward (num_layer=2, pool=None).

    x_ncl: (N, C_in, L) float32 (PyTorch NCL layout).
    w1: (C_out, C_in, 3),  b1: (C_out,)
    w2: (C_out, C_out, 3), b2: (C_out,)
    Returns (N, C_out, L) float32.
    """
    n, c_in, length = x_ncl.shape
    c_out = w1.shape[0]
    cp_in = _round_up(c_in, 8)
    cp_out = _round_up(c_out, 8)

    # Fuse batch onto the lane axis: (N, C_in, L) -> (Cp_in, N*L).
    x2d = jnp.transpose(x_ncl, (1, 0, 2)).reshape(c_in, n * length)
    x2d = jnp.pad(x2d.astype(jnp.float32), ((0, cp_in - c_in), (0, 0)))

    w1_aug = _augment_weight(w1, b1, cp_in, cp_out)
    w2_aug = _augment_weight(w2, b2, cp_out, cp_out)

    if seg_per_tile is None:
        per_seg_bytes = 4 * length * (4 * cp_in + 8 * cp_out + 16)
        seg_per_tile = _pick_seg_per_tile(n, length, per_seg_bytes)
    w_tile = seg_per_tile * length
    grid = (n // seg_per_tile,)

    block_bytes = 4 * w_tile * (2 * cp_in + (3 * cp_in + 8)
                                + (3 * cp_out + 8) + 4 * cp_out)
    vmem_limit = int(min(100 << 20, max(32 << 20, 2 * block_bytes)))

    out2d = pl.pallas_call(
        _make_kernel(length),
        out_shape=jax.ShapeDtypeStruct((cp_out, n * length), jnp.float32),
        grid_spec=pltpu.PrefetchScalarGridSpec(
            num_scalar_prefetch=0,
            grid=grid,
            in_specs=[
                pl.BlockSpec((cp_in, w_tile), lambda i: (0, i)),
                pl.BlockSpec(w1_aug.shape, lambda i: (0, 0)),
                pl.BlockSpec(w2_aug.shape, lambda i: (0, 0)),
            ],
            out_specs=pl.BlockSpec((cp_out, w_tile), lambda i: (0, i)),
        ),
        compiler_params=pltpu.CompilerParams(
            dimension_semantics=("parallel",),
            vmem_limit_bytes=vmem_limit),
    )(x2d, w1_aug, w2_aug)

    # (Cp_out, N*L) -> (N, C_out, L), dropping channel padding.
    return jnp.transpose(out2d[:c_out].reshape(c_out, n, length), (1, 0, 2))


def _conv_block_ref(x_ncl, w1, b1, w2, b2):
    """Pure-JAX reference mirroring the PyTorch module (NCL conv, k=3,s=1,p=1)."""

    def conv1d(x, w, b):
        y = jax.lax.conv_general_dilated(
            x, w, window_strides=(1,), padding=((1, 1),),
            dimension_numbers=("NCH", "OIH", "NCH"))
        return y + b[None, :, None]

    h = jnp.maximum(conv1d(x_ncl, w1, b1), 0.0)
    return jnp.maximum(conv1d(h, w2, b2), 0.0)


if __name__ == "__main__":
    key = jax.random.PRNGKey(0)
    k_x, k_w1, k_b1, k_w2, k_b2 = jax.random.split(key, 5)

    # Small but lane-aligned spatial size so stores are unmasked vst.
    N, C_IN, C_OUT, L = 2, 4, 8, 128

    x = jax.random.normal(k_x, (N, C_IN, L), dtype=jnp.float32)
    # deterministic synthetic parameters (roughly PyTorch-scale), PyTorch layout
    w1 = jax.random.normal(k_w1, (C_OUT, C_IN, 3), dtype=jnp.float32) * 0.2
    b1 = jax.random.normal(k_b1, (C_OUT,), dtype=jnp.float32) * 0.1
    w2 = jax.random.normal(k_w2, (C_OUT, C_OUT, 3), dtype=jnp.float32) * 0.2
    b2 = jax.random.normal(k_b2, (C_OUT,), dtype=jnp.float32) * 0.1

    out = conv_block_pallas(x, w1, b1, w2, b2)
    out = jax.block_until_ready(out)

    ref = _conv_block_ref(x, w1, b1, w2, b2)
    assert out.shape == (N, C_OUT, L), out.shape
    assert jnp.allclose(out, ref, atol=1e-5, rtol=1e-5), "mismatch vs reference"

    print("KERNEL_OK")
</pallas_src>

<mosaic_0001>
module attributes {stable_mosaic.version = 11 : i64} {
  func.func @kernel(%arg0: i32, %arg1: memref<8x128xf32, #tpu.memory_space<vmem>>, %arg2: memref<8x32xf32, #tpu.memory_space<vmem>>, %arg3: memref<8x32xf32, #tpu.memory_space<vmem>>, %arg4: memref<8x128xf32, #tpu.memory_space<vmem>>) attributes {dimension_semantics = [#tpu.dimension_semantics<parallel>], iteration_bounds = array<i64: 2>, scalar_prefetch = 0 : i64, scratch_operands = 0 : i64, tpu.core_type = #tpu.core_type<tc>, window_params = [{transform_indices = @transform_0, window_bounds = array<i64: 8, 128>}, {pipeline_mode = #tpu.pipeline_mode<synchronous>, transform_indices = @transform_1, window_bounds = array<i64: 8, 32>}, {pipeline_mode = #tpu.pipeline_mode<synchronous>, transform_indices = @transform_2, window_bounds = array<i64: 8, 32>}, {transform_indices = @transform_3, window_bounds = array<i64: 8, 128>}]} {
    %0 = tpu.iota {dimensions = array<i32: 1>} : vector<1x128xi32>
    %c128_i32 = arith.constant 128 : i32
    %c0_i32 = arith.constant 0 : i32
    %1 = arith.cmpi eq, %c128_i32, %c0_i32 : i32
    %c1_i32 = arith.constant 1 : i32
    %2 = arith.select %1, %c1_i32, %c128_i32 : i32
    %3 = vector.broadcast %2 : i32 to vector<1x128xi32>
    %4 = arith.remsi %0, %3 : vector<1x128xi32>
    %c0_i32_0 = arith.constant 0 : i32
    %5 = vector.broadcast %c0_i32_0 : i32 to vector<1x128xi32>
    %6 = arith.cmpi ne, %4, %5 : vector<1x128xi32>
    %c0_i32_1 = arith.constant 0 : i32
    %7 = vector.broadcast %c0_i32_1 : i32 to vector<1x128xi32>
    %8 = arith.cmpi slt, %4, %7 : vector<1x128xi32>
    %c0_i32_2 = arith.constant 0 : i32
    %9 = arith.cmpi slt, %2, %c0_i32_2 : i32
    %10 = vector.broadcast %9 : i1 to vector<1x128xi1>
    %11 = vector.broadcast %10 : vector<1x128xi1> to vector<1x128xi1>
    %12 = arith.xori %8, %11 : vector<1x128xi1>
    %13 = arith.andi %12, %6 : vector<1x128xi1>
    %14 = vector.broadcast %2 : i32 to vector<1x128xi32>
    %15 = arith.addi %4, %14 : vector<1x128xi32>
    %16 = arith.select %13, %15, %4 : vector<1x128xi1>, vector<1x128xi32>
    %c0_i32_3 = arith.constant 0 : i32
    %17 = vector.broadcast %c0_i32_3 : i32 to vector<1x128xi32>
    %18 = arith.cmpi ne, %16, %17 : vector<1x128xi32>
    %19 = arith.extui %18 : vector<1x128xi1> to vector<1x128xi32>
    %20 = arith.sitofp %19 : vector<1x128xi32> to vector<1x128xf32>
    %c127_i32 = arith.constant 127 : i32
    %21 = vector.broadcast %c127_i32 : i32 to vector<1x128xi32>
    %22 = arith.cmpi ne, %16, %21 : vector<1x128xi32>
    %23 = arith.extui %22 : vector<1x128xi1> to vector<1x128xi32>
    %24 = arith.sitofp %23 : vector<1x128xi32> to vector<1x128xf32>
    %25 = tpu.iota {dimensions = array<i32: 0>} : vector<8x128xi32>
    %c0_i32_4 = arith.constant 0 : i32
    %26 = vector.broadcast %c0_i32_4 : i32 to vector<8x128xi32>
    %27 = arith.cmpi eq, %25, %26 : vector<8x128xi32>
    %28 = arith.extui %27 : vector<8x128xi1> to vector<8x128xi32>
    %29 = arith.sitofp %28 : vector<8x128xi32> to vector<8x128xf32>
    %c0 = arith.constant 0 : index
    %c0_5 = arith.constant 0 : index
    %30 = vector.load %arg1[%c0, %c0_5] : memref<8x128xf32, #tpu.memory_space<vmem>>, vector<8x128xf32>
    %c0_6 = arith.constant 0 : index
    %c0_7 = arith.constant 0 : index
    %31 = vector.load %arg2[%c0_6, %c0_7] : memref<8x32xf32, #tpu.memory_space<vmem>>, vector<8x32xf32>
    %c1_i32_8 = arith.constant 1 : i32
    %32 = tpu.dynamic_rotate %30 by %c1_i32_8 dim 1 : vector<8x128xf32>, i32 -> vector<8x128xf32>
    %33 = vector.broadcast %20 : vector<1x128xf32> to vector<8x128xf32>
    %34 = arith.mulf %32, %33 : vector<8x128xf32>
    %c127_i32_9 = arith.constant 127 : i32
    %35 = tpu.dynamic_rotate %30 by %c127_i32_9 dim 1 : vector<8x128xf32>, i32 -> vector<8x128xf32>
    %36 = vector.broadcast %24 : vector<1x128xf32> to vector<8x128xf32>
    %37 = arith.mulf %35, %36 : vector<8x128xf32>
    %38 = tpu.concatenate %34, %30, %37, %29 in 0 : vector<8x128xf32>, vector<8x128xf32>, vector<8x128xf32>, vector<8x128xf32> -> vector<32x128xf32>
    %cst = arith.constant dense<0.000000e+00> : vector<8x128xf32>
    %39 = tpu.matmul %31, %38, %cst {dimension_numbers = #tpu.dot_dimension_numbers<[1], [0], [0], [1], [0, 0, 1, 1], [], []>} : vector<8x32xf32>, vector<32x128xf32>, vector<8x128xf32> -> vector<8x128xf32>
    %cst_10 = arith.constant 0.000000e+00 : f32
    %40 = vector.broadcast %cst_10 : f32 to vector<8x128xf32>
    %41 = arith.maximumf %39, %40 : vector<8x128xf32>
    %c0_11 = arith.constant 0 : index
    %c0_12 = arith.constant 0 : index
    %42 = vector.load %arg3[%c0_11, %c0_12] : memref<8x32xf32, #tpu.memory_space<vmem>>, vector<8x32xf32>
    %c1_i32_13 = arith.constant 1 : i32
    %43 = tpu.dynamic_rotate %41 by %c1_i32_13 dim 1 : vector<8x128xf32>, i32 -> vector<8x128xf32>
    %44 = vector.broadcast %20 : vector<1x128xf32> to vector<8x128xf32>
    %45 = arith.mulf %43, %44 : vector<8x128xf32>
    %c127_i32_14 = arith.constant 127 : i32
    %46 = tpu.dynamic_rotate %41 by %c127_i32_14 dim 1 : vector<8x128xf32>, i32 -> vector<8x128xf32>
    %47 = vector.broadcast %24 : vector<1x128xf32> to vector<8x128xf32>
    %48 = arith.mulf %46, %47 : vector<8x128xf32>
    %49 = tpu.concatenate %45, %41, %48, %29 in 0 : vector<8x128xf32>, vector<8x128xf32>, vector<8x128xf32>, vector<8x128xf32> -> vector<32x128xf32>
    %cst_15 = arith.constant dense<0.000000e+00> : vector<8x128xf32>
    %50 = tpu.matmul %42, %49, %cst_15 {dimension_numbers = #tpu.dot_dimension_numbers<[1], [0], [0], [1], [0, 0, 1, 1], [], []>} : vector<8x32xf32>, vector<32x128xf32>, vector<8x128xf32> -> vector<8x128xf32>
    %cst_16 = arith.constant 0.000000e+00 : f32
    %51 = vector.broadcast %cst_16 : f32 to vector<8x128xf32>
    %52 = arith.maximumf %50, %51 : vector<8x128xf32>
    %c0_17 = arith.constant 0 : index
    %c0_18 = arith.constant 0 : index
    %53 = vector.load %arg4[%c0_17, %c0_18] : memref<8x128xf32, #tpu.memory_space<vmem>>, vector<8x128xf32>
    tpu.vector_store %arg4[%c0_17, %c0_18], %52 {strides = array<i32>} : memref<8x128xf32, #tpu.memory_space<vmem>>, vector<8x128xf32>,
    return
  }
  func.func @transform_0(%arg0: i32) -> (i32, i32) {
    %c0_i32 = arith.constant 0 : i32
    %c0_i32_0 = arith.constant 0 : i32
    return %c0_i32, %arg0 : i32, i32
  }
  func.func @transform_1(%arg0: i32) -> (i32, i32) {
    %c0_i32 = arith.constant 0 : i32
    %c0_i32_0 = arith.constant 0 : i32
    %c0_i32_1 = arith.constant 0 : i32
    return %c0_i32, %c0_i32_0 : i32, i32
  }
  func.func @transform_2(%arg0: i32) -> (i32, i32) {
    %c0_i32 = arith.constant 0 : i32
    %c0_i32_0 = arith.constant 0 : i32
    %c0_i32_1 = arith.constant 0 : i32
    return %c0_i32, %c0_i32_0 : i32, i32
  }
  func.func @transform_3(%arg0: i32) -> (i32, i32) {
    %c0_i32 = arith.constant 0 : i32
    %c0_i32_0 = arith.constant 0 : i32
    return %c0_i32, %arg0 : i32, i32
  }
}

</mosaic_0001>

<llo_original>
// kernel: tpu_custom_call.1
$region0: #{tpu_custom_call.1}
  #allocation0 [shape = 'u32[]', space=smem, size = 0x4, offset = 0x4, fixed_abs, tag = 'smem constant byte address 0x4 - core index']
  #allocation1 [shape = 'u32[144,128]{1,0:T(1,128)}', space=vmem, size = 0x12000, scoped, tag = 'internal scratch']
  %s0 = inlined_call_operand.hbm [shape: f32[8,256], index: 0, kind: input, shape index: {}]
  %s1 = inlined_call_operand.hbm [shape: f32[8,32], index: 1, kind: input, shape index: {}]
  %s2 = inlined_call_operand.hbm [shape: f32[8,32], index: 2, kind: input, shape index: {}]
  %s3 = inlined_call_operand.hbm [shape: f32[8,256], index: 3, kind: output, shape index: {}]
  %s4 = sld [smem:[#allocation0]]
  $region57: #{tpu_custom_call.1} parent=0
    _
  %s6 = ssub.s32 1, %s4
  %s7 = scalar_select 0, %s6, %s4
  $region1: #{tpu_custom_call.1} parent=0
    #allocation2 [shape = 'u8[8192]{0}', space=vmem, size = 0x2000, scoped, tag = 'input window, operand 0']
    #allocation3 [shape = 's32[2]{0}', space=sflag, size = 0x8, scoped, tag = 'scoped memory for tpu_custom_call.1']
    #allocation4 [shape = 's32[2]{0}', space=sflag, size = 0x8, scoped, tag = 'scoped memory for tpu_custom_call.1']
    #allocation5 [shape = 'u8[4096]{0}', space=vmem, size = 0x1000, scoped, tag = 'input window, operand 1, single buffered']
    #allocation6 [shape = 's32[1]{0}', space=sflag, size = 0x4, scoped, tag = 'scoped memory for tpu_custom_call.1']
    #allocation7 [shape = 'u8[4096]{0}', space=vmem, size = 0x1000, scoped, tag = 'input window, operand 2, single buffered']
    #allocation8 [shape = 'u8[8192]{0}', space=vmem, size = 0x2000, scoped, tag = 'output window, operand 0']
    %8 = vsyncpa [#allocation3], 0
    %s9 = scalar_lea.sflag [#allocation3], 1
    %10 = vsyncpa %s9, 0
    %11 = vsyncpa [#allocation6], 0
    %12 = vsyncpa [#allocation4], 0
    %s13 = scalar_lea.sflag [#allocation4], 1
    %14 = vsyncpa %s13, 0
    loop: start=0, step=1, limit=4
    $region2: #{tpu_custom_call.1} parent=1 // loop_pre_header
      _
    $region3: #{tpu_custom_call.1} parent=1 // loop_header
      %s16 = sphi 0, %s20
      %p17 = scmp.ge.s32.totalorder %s16, 4
      %s26 = sphi 0, %s28
      %s29 = sphi 0, %s26
      %s30 = sphi 0, %s29
      %s46 = sphi 0, %s30
      %s50 = sphi 0, %s50
      %s52 = sphi 0, %s50
      %s53 = sphi 0, %s52
      %s67 = sphi 0, %s53
      %s71 = sphi 0, %s71
      %s73 = sphi 0, %s71
      %s74 = sphi 0, %s73
      %s88 = sphi 0, %s74
      %s94 = sphi 0, %s96
      %s97 = sphi 0, %s94
      %s98 = sphi 0, %s97
      %s114 = sphi 0, %s98
    $region4: #{tpu_custom_call.1} parent=1 // loop_header_branch
      %19 = sbr.rel (%p17) target = $region8
    $region5: #{tpu_custom_call.1} parent=1 // loop_body
      %s21 = ssub.s32 %s16, 1
      %s22 = ssub.s32 %s16, 2
      %s23 = sadd.s32 %s16, 1
      %s24 = ssub.s32 %s16, %s23
      %p25 = scmp.eq.s32.totalorder %s24, 0
      %s27 = sadd.s32 %s26, 1
      %s28 = scalar_select %p25, %s26, %s27
      %p31 = pneg %p25
      %p32 = scmp.eq.s32.totalorder %s16, 1
      %p33 = por %p31, %p32
      %p34 = scmp.ne.s32.totalorder %s26, %s29
      %p35 = scmp.eq.s32.totalorder %s16, 0
      %p36 = por %p34, %p35
      %p37 = scmp.ne.s32.totalorder %s26, %s29
      %p38 = scmp.eq.s32.totalorder %s21, 1
      %p39 = por %p37, %p38
      %p40 = scmp.ne.s32.totalorder %s29, %s30
      %p41 = scmp.eq.s32.totalorder %s21, 0
      %p42 = por %p40, %p41
      %p43 = scmp.ne.s32.totalorder %s29, %s30
      %p44 = scmp.eq.s32.totalorder %s22, 1
      %p45 = por %p43, %p44
      %p47 = scmp.ne.s32.totalorder %s30, %s46
      %p48 = scmp.eq.s32.totalorder %s22, 0
      %p49 = por %p47, %p48
      %s51 = sadd.s32 %s50, 1
      %p54 = scmp.eq.s32.totalorder %s16, 1
      %p55 = scmp.ne.s32.totalorder %s50, %s52
      %p56 = scmp.eq.s32.totalorder %s16, 0
      %p57 = por %p55, %p56
      %p58 = scmp.ne.s32.totalorder %s50, %s52
      %p59 = scmp.eq.s32.totalorder %s21, 1
      %p60 = por %p58, %p59
      %p61 = scmp.ne.s32.totalorder %s52, %s53
      %p62 = scmp.eq.s32.totalorder %s21, 0
      %p63 = por %p61, %p62
      %p64 = scmp.ne.s32.totalorder %s52, %s53
      %p65 = scmp.eq.s32.totalorder %s22, 1
      %p66 = por %p64, %p65
      %p68 = scmp.ne.s32.totalorder %s53, %s67
      %p69 = scmp.eq.s32.totalorder %s22, 0
      %p70 = por %p68, %p69
      %s72 = sadd.s32 %s71, 1
      %p75 = scmp.eq.s32.totalorder %s16, 1
      %p76 = scmp.ne.s32.totalorder %s71, %s73
      %p77 = scmp.eq.s32.totalorder %s16, 0
      %p78 = por %p76, %p77
      %p79 = scmp.ne.s32.totalorder %s71, %s73
      %p80 = scmp.eq.s32.totalorder %s21, 1
      %p81 = por %p79, %p80
      %p82 = scmp.ne.s32.totalorder %s73, %s74
      %p83 = scmp.eq.s32.totalorder %s21, 0
      %p84 = por %p82, %p83
      %p85 = scmp.ne.s32.totalorder %s73, %s74
      %p86 = scmp.eq.s32.totalorder %s22, 1
      %p87 = por %p85, %p86
      %p89 = scmp.ne.s32.totalorder %s74, %s88
      %p90 = scmp.eq.s32.totalorder %s22, 0
      %p91 = por %p89, %p90
      %s92 = ssub.s32 %s16, %s23
      %p93 = scmp.eq.s32.totalorder %s92, 0
      %s95 = sadd.s32 %s94, 1
      %s96 = scalar_select %p93, %s94, %s95
      %p99 = pneg %p93
      %p100 = scmp.eq.s32.totalorder %s16, 1
      %p101 = por %p99, %p100
      %p102 = scmp.ne.s32.totalorder %s94, %s97
      %p103 = scmp.eq.s32.totalorder %s16, 0
      %p104 = por %p102, %p103
      %p105 = scmp.ne.s32.totalorder %s94, %s97
      %p106 = scmp.eq.s32.totalorder %s21, 1
      %p107 = por %p105, %p106
      %p108 = scmp.ne.s32.totalorder %s97, %s98
      %p109 = scmp.eq.s32.totalorder %s21, 0
      %p110 = por %p108, %p109
      %p111 = scmp.ne.s32.totalorder %s97, %s98
      %p112 = scmp.eq.s32.totalorder %s22, 1
      %p113 = por %p111, %p112
      %p115 = scmp.ne.s32.totalorder %s98, %s114
      %p116 = scmp.eq.s32.totalorder %s22, 0
      %p117 = por %p115, %p116
      %p118 = scmp.le.s32.totalorder 1, %s16
      %p119 = scmp.lt.s32.totalorder %s16, 3
      %p120 = pnand %p118, %p119
      %p121 = pneg %p120
      // Predicated region
      $region9: #{tpu_custom_call.1} parent=5 // pred_check
        _
      $region10: #{tpu_custom_call.1} parent=5 // pred_check_branch
        %123 = sbr.rel (%p120) target = $region12
      $region11: #{tpu_custom_call.1} parent=5 // pred_region
        %s124 = ssub.s32 %s16, 1
        // Predicated region
        $region13: #{tpu_custom_call.1} parent=11 // pred_check
          %p125 = pneg %p63
        $region14: #{tpu_custom_call.1} parent=11 // pred_check_branch
          %127 = sbr.rel (%p125) target = $region16
        $region15: #{tpu_custom_call.1} parent=11 // pred_region
          %s129 = ssub.s32 128, 128
          %130 = vsyncadd [#allocation6], %s129
          %s132 = sshll.u32 [#allocation5], 4
          %s133 = int_to_ptr.vmem [resolvable:$true] %s132
          %135 = dma.hbm_to_vmem [thread:$0]  %s1, 128, %s133, [#allocation6]
        $region16: #{tpu_custom_call.1} parent=11 // pred_fallthru
          _
        // Predicated region
        $region17: #{tpu_custom_call.1} parent=11 // pred_check
          %p136 = pneg %p84
        $region18: #{tpu_custom_call.1} parent=11 // pred_check_branch
          %138 = sbr.rel (%p136) target = $region20
        $region19: #{tpu_custom_call.1} parent=11 // pred_region
          %s140 = ssub.s32 128, 128
          %141 = vsyncadd [#allocation6], %s140
          %s143 = sshll.u32 [#allocation7], 4
          %s144 = int_to_ptr.vmem [resolvable:$true] %s143
          %146 = dma.hbm_to_vmem [thread:$0]  %s2, 128, %s144, [#allocation6]
        $region20: #{tpu_custom_call.1} parent=11 // pred_fallthru
          _
      $region12: #{tpu_custom_call.1} parent=5 // pred_fallthru
        _
      %p147 = scmp.lt.s32.totalorder %s16, 2
      // Predicated region
      $region21: #{tpu_custom_call.1} parent=5 // pred_check
        %p148 = pneg %p147
      $region22: #{tpu_custom_call.1} parent=5 // pred_check_branch
        %150 = sbr.rel (%p148) target = $region24
      $region23: #{tpu_custom_call.1} parent=5 // pred_region
        // Predicated region
        $region25: #{tpu_custom_call.1} parent=23 // pred_check
          %p151 = pneg %p36
        $region26: #{tpu_custom_call.1} parent=23 // pred_check_branch
          %153 = sbr.rel (%p151) target = $region28
        $region27: #{tpu_custom_call.1} parent=23 // pred_region
          %s154 = sand.u32 %s26, 1
          %s155 = scalar_lea.sflag [#allocation3], %s154
          %s156 = sand.u32 %s26, 1
          %s157 = smul.addr %s156, 8
          %s158 = scalar_lea.vmem [#allocation2], %s157
          %s160 = ssub.s32 128, 128
          %161 = vsyncadd %s155, %s160
          %s162 = smul.addr %s16, 128
          %s163 = scalar_lea.hbm %s0, %s162
          %s165 = sshll.u32 %s158, 4
          %s166 = int_to_ptr.vmem [resolvable:$true] %s165
          %168 = dma.hbm_to_vmem [thread:$0]  %s163, 128, %s166, %s155
        $region28: #{tpu_custom_call.1} parent=23 // pred_fallthru
          _
      $region24: #{tpu_custom_call.1} parent=5 // pred_fallthru
        _
      %p169 = scmp.le.s32.totalorder 1, %s16
      %p170 = scmp.lt.s32.totalorder %s16, 3
      %p171 = pnand %p169, %p170
      %p172 = pneg %p171
      // Predicated region
      $region29: #{tpu_custom_call.1} parent=5 // pred_check
        _
      $region30: #{tpu_custom_call.1} parent=5 // pred_check_branch
        %174 = sbr.rel (%p171) target = $region32
      $region31: #{tpu_custom_call.1} parent=5 // pred_region
        %s175 = ssub.s32 %s16, 1
        %s176 = sand.u32 %s29, 1
        %s177 = scalar_lea.sflag [#allocation3], %s176
        %s178 = sand.u32 %s29, 1
        %s179 = smul.addr %s178, 8
        %s180 = scalar_lea.vmem [#allocation2], %s179
        // Predicated region
        $region33: #{tpu_custom_call.1} parent=31 // pred_check
          %p181 = pneg %p42
        $region34: #{tpu_custom_call.1} parent=31 // pred_check_branch
          %183 = sbr.rel (%p181) target = $region36
        $region35: #{tpu_custom_call.1} parent=31 // pred_region
          %184 = dma.done %s177, 128
        $region36: #{tpu_custom_call.1} parent=31 // pred_fallthru
          _
        // Predicated region
        $region37: #{tpu_custom_call.1} parent=31 // pred_check
          %p185 = pneg %p63
        $region38: #{tpu_custom_call.1} parent=31 // pred_check_branch
          %187 = sbr.rel (%p185) target = $region40
        $region39: #{tpu_custom_call.1} parent=31 // pred_region
          %188 = dma.done [#allocation6], 128
        $region40: #{tpu_custom_call.1} parent=31 // pred_fallthru
          _
        // Predicated region
        $region41: #{tpu_custom_call.1} parent=31 // pred_check
          %p189 = pneg %p84
        $region42: #{tpu_custom_call.1} parent=31 // pred_check_branch
          %191 = sbr.rel (%p189) target = $region44
        $region43: #{tpu_custom_call.1} parent=31 // pred_region
          %192 = dma.done [#allocation6], 128
        $region44: #{tpu_custom_call.1} parent=31 // pred_fallthru
          _
        %s193 = sand.u32 %s29, 1
        %s194 = scalar_lea.sflag [#allocation3], %s193
        %s195 = sand.u32 %s29, 1
        %s196 = smul.addr %s195, 8
        %s197 = scalar_lea.vmem [#allocation2], %s196
        %p198 = pneg %p42
        %p199 = pneg %p39
        %p200 = pneg %p63
        %p201 = pneg %p60
        %p202 = pneg %p84
        %p203 = pneg %p81
        %p204 = pneg %p110
        %p205 = pneg %p107
        %s206 = sand.u32 %s97, 1
        %s207 = scalar_lea.sflag [#allocation4], %s206
        %s208 = sand.u32 %s97, 1
        %s209 = smul.addr %s208, 8
        %s210 = scalar_lea.vmem [#allocation8], %s209
        %v211 = vlaneseq
        %v212 = vand.u32 %v211, 127
        %vm213 = vcmp.lt.s32.totalorder %v212, 0
        %v214 = vsub.s32 0, %v212
        %v215 = vsel %vm213, %v214, %v212
        %v216 = vshrl.u32 %v215, 7
        %v217 = vand.u32 %v215, 127
        %v218 = vsub.s32 0, %v217
        %v219 = vsel %vm213, %v218, %v217
        %vm220 = vcmp.ne.s32.totalorder %v219, 0
        %vm221 = vcmp.lt.s32.totalorder %v219, 0
        %vm222 = vmand %vm221, %vm220
        %v223 = vadd.s32 %v219, 128
        %v224 = vsel %vm222, %v223, %v219
        %vm225 = vcmp.ne.s32.totalorder %v224, 0
        %v226 = vsel %vm225, 1, 0
        %v227 = vcvt.s32.f32 %v226
        %vm228 = vcmp.ne.s32.totalorder %v224, 127
        %v229 = vsel %vm228, 1, 0
        %v230 = vcvt.s32.f32 %v229
        %v231 = vlaneseq
        %v232 = vshrl.u32 %v231, 7
        %vm233 = vcmp.eq.s32.totalorder %v232, 0
        %v234 = vsel %vm233, 1, 0
        %v235 = vcvt.s32.f32 %v234
        %v236 = vld [vmem:[%s180] sm:$0xff]
        %v237 = vld [vmem:[#allocation5] sm:$0xff]
        %238 = vrot.lane.b32.xlu0 %v236, 1
        %v239 = vpop.permute.xlu0 %238
        %v240 = vmul.f32 %v239, %v227
        %241 = vrot.lane.b32.xlu0 %v236, 127
        %v242 = vpop.permute.xlu0 %241
        %v243 = vmul.f32 %v242, %v230
        %vm244 = vcmask 261120
        %v246 = vsel %vm244, %v237, 0
        %248 = vmatprep.subr.mxu0 0.0
        %249 = vmatpush1.msra.mxu0 0.0
        %250 = vmatprep.subr.mxu0 0.0
        %251 = vmatpush1.msra.mxu0 0.0
        %252 = vmatprep.subr.mxu0 0.0
        %253 = vmatpush1.msra.mxu0 0.0
        %254 = vmatprep.subr.mxu0 0.0
        %255 = vmatpush1.msra.mxu0 0.0
        %256 = vmatprep.subr.mxu0 0.0
        %257 = vmatpush1.msra.mxu0 0.0
        %258 = vmatprep.subr.mxu0 0.0
        %259 = vmatpush1.msra.mxu0 0.0
        %260 = vmatprep.subr.mxu0 0.0
        %261 = vmatpush1.msra.mxu0 0.0
        %262 = vmatprep.subr.mxu0 0.0
        %263 = vmatpush1.msra.mxu0 0.0
        %264 = vmatprep.subr.mxu0 0.0
        %265 = vmatpush1.msra.mxu0 0.0
        %266 = vmatprep.subr.mxu0 0.0
        %267 = vmatpush1.msra.mxu0 0.0
        %268 = vmatprep.subr.mxu0 0.0
        %269 = vmatpush1.msra.mxu0 0.0
        %270 = vmatprep.subr.mxu0 0.0
        %271 = vmatpush1.msra.mxu0 0.0
        %272 = vmatprep.subr.mxu0 0.0
        %273 = vmatpush1.msra.mxu0 %v235
        %274 = vmatprep.subr.mxu0 0.0
        %275 = vmatpush1.msra.mxu0 %v243
        %276 = vmatprep.subr.mxu0 0.0
        %277 = vmatpush1.msra.mxu0 %v236
        %278 = vmatprep.subr.mxu0 0.0
        %279 = vmatpush1.msra.mxu0 %v240
        %280 = vmatprep.subr.mxu0 0.0
        %281 = vmatpush2.msra.mxu0 0.0
        %282 = vmatprep.subr.mxu0 0.0
        %283 = vmatpush2.msra.mxu0 0.0
        %284 = vmatprep.subr.mxu0 0.0
        %285 = vmatpush2.msra.mxu0 0.0
        %286 = vmatprep.subr.mxu0 0.0
        %287 = vmatpush2.msra.mxu0 0.0
        %288 = vmatprep.subr.mxu0 0.0
        %289 = vmatpush2.msra.mxu0 0.0
        %290 = vmatprep.subr.mxu0 0.0
        %291 = vmatpush2.msra.mxu0 0.0
        %292 = vmatprep.subr.mxu0 0.0
        %293 = vmatpush2.msra.mxu0 0.0
        %294 = vmatprep.subr.mxu0 0.0
        %295 = vmatpush2.msra.mxu0 0.0
        %296 = vmatprep.subr.mxu0 0.0
        %297 = vmatpush2.msra.mxu0 0.0
        %298 = vmatprep.subr.mxu0 0.0
        %299 = vmatpush2.msra.mxu0 0.0
        %300 = vmatprep.subr.mxu0 0.0
        %301 = vmatpush2.msra.mxu0 0.0
        %302 = vmatprep.subr.mxu0 0.0
        %303 = vmatpush2.msra.mxu0 0.0
        %304 = vmatprep.subr.mxu0 0.0
        %305 = vmatpush2.msra.mxu0 0.0
        %306 = vmatprep.subr.mxu0 0.0
        %307 = vmatpush2.msra.mxu0 0.0
        %308 = vmatprep.subr.mxu0 0.0
        %309 = vmatpush2.msra.mxu0 0.0
        %310 = vmatprep.subr.mxu0 0.0
        %311 = vmatpush2.msra.mxu0 0.0
        %312 = vmatprep.mubr.f32.mxu0 0.0
        %313 = vmatmul.mubr.f32.gmra.mxu0 %v246
        %v314 = vpop.f32.mrf.mxu0
        %v315 = vadd.f32 0.0, %v314
        %v316 = vpop.f32.mrf.mxu0
        %317 = vdwg.mxu0
        %v318 = vmax.f32 %v315, 0.0
        %v319 = vld [vmem:[#allocation7] sm:$0xff]
        %320 = vrot.lane.b32.xlu0 %v318, 1
        %v321 = vpop.permute.xlu0 %320
        %v322 = vmul.f32 %v321, %v227
        %323 = vrot.lane.b32.xlu0 %v318, 127
        %v324 = vpop.permute.xlu0 %323
        %v325 = vmul.f32 %v324, %v230
        %v327 = vsel %vm244, %v319, 0
        %329 = vmatprep.subr.mxu0 0.0
        %330 = vmatpush1.msra.mxu0 0.0
        %331 = vmatprep.subr.mxu0 0.0
        %332 = vmatpush1.msra.mxu0 0.0
        %333 = vmatprep.subr.mxu0 0.0
        %334 = vmatpush1.msra.mxu0 0.0
        %335 = vmatprep.subr.mxu0 0.0
        %336 = vmatpush1.msra.mxu0 0.0
        %337 = vmatprep.subr.mxu0 0.0
        %338 = vmatpush1.msra.mxu0 0.0
        %339 = vmatprep.subr.mxu0 0.0
        %340 = vmatpush1.msra.mxu0 0.0
        %341 = vmatprep.subr.mxu0 0.0
        %342 = vmatpush1.msra.mxu0 0.0
        %343 = vmatprep.subr.mxu0 0.0
        %344 = vmatpush1.msra.mxu0 0.0
        %345 = vmatprep.subr.mxu0 0.0
        %346 = vmatpush1.msra.mxu0 0.0
        %347 = vmatprep.subr.mxu0 0.0
        %348 = vmatpush1.msra.mxu0 0.0
        %349 = vmatprep.subr.mxu0 0.0
        %350 = vmatpush1.msra.mxu0 0.0
        %351 = vmatprep.subr.mxu0 0.0
        %352 = vmatpush1.msra.mxu0 0.0
        %353 = vmatprep.subr.mxu0 0.0
        %354 = vmatpush1.msra.mxu0 %v235
        %355 = vmatprep.subr.mxu0 0.0
        %356 = vmatpush1.msra.mxu0 %v325
        %357 = vmatprep.subr.mxu0 0.0
        %358 = vmatpush1.msra.mxu0 %v318
        %359 = vmatprep.subr.mxu0 0.0
        %360 = vmatpush1.msra.mxu0 %v322
        %361 = vmatprep.subr.mxu0 0.0
        %362 = vmatpush2.msra.mxu0 0.0
        %363 = vmatprep.subr.mxu0 0.0
        %364 = vmatpush2.msra.mxu0 0.0
        %365 = vmatprep.subr.mxu0 0.0
        %366 = vmatpush2.msra.mxu0 0.0
        %367 = vmatprep.subr.mxu0 0.0
        %368 = vmatpush2.msra.mxu0 0.0
        %369 = vmatprep.subr.mxu0 0.0
        %370 = vmatpush2.msra.mxu0 0.0
        %371 = vmatprep.subr.mxu0 0.0
        %372 = vmatpush2.msra.mxu0 0.0
        %373 = vmatprep.subr.mxu0 0.0
        %374 = vmatpush2.msra.mxu0 0.0
        %375 = vmatprep.subr.mxu0 0.0
        %376 = vmatpush2.msra.mxu0 0.0
        %377 = vmatprep.subr.mxu0 0.0
        %378 = vmatpush2.msra.mxu0 0.0
        %379 = vmatprep.subr.mxu0 0.0
        %380 = vmatpush2.msra.mxu0 0.0
        %381 = vmatprep.subr.mxu0 0.0
        %382 = vmatpush2.msra.mxu0 0.0
        %383 = vmatprep.subr.mxu0 0.0
        %384 = vmatpush2.msra.mxu0 0.0
        %385 = vmatprep.subr.mxu0 0.0
        %386 = vmatpush2.msra.mxu0 0.0
        %387 = vmatprep.subr.mxu0 0.0
        %388 = vmatpush2.msra.mxu0 0.0
        %389 = vmatprep.subr.mxu0 0.0
        %390 = vmatpush2.msra.mxu0 0.0
        %391 = vmatprep.subr.mxu0 0.0
        %392 = vmatpush2.msra.mxu0 0.0
        %393 = vmatprep.mubr.f32.mxu0 0.0
        %394 = vmatmul.mubr.f32.gmra.mxu0 %v327
        %v395 = vpop.f32.mrf.mxu0
        %v396 = vadd.f32 0.0, %v395
        %v397 = vpop.f32.mrf.mxu0
        %398 = vdwg.mxu0
        %v399 = vmax.f32 %v396, 0.0
        %400 = vst [vmem:[%s210] sm:$0xff] %v399
        %s401 = sand.u32 %s97, 1
        %s402 = scalar_lea.sflag [#allocation4], %s401
        %s403 = sand.u32 %s97, 1
        %s404 = smul.addr %s403, 8
        %s405 = scalar_lea.vmem [#allocation8], %s404
        // Predicated region
        $region45: #{tpu_custom_call.1} parent=31 // pred_check
          %p406 = pneg %p107
        $region46: #{tpu_custom_call.1} parent=31 // pred_check_branch
          %408 = sbr.rel (%p406) target = $region48
        $region47: #{tpu_custom_call.1} parent=31 // pred_region
          %s410 = ssub.s32 128, 128
          %411 = vsyncadd %s402, %s410
          %s412 = smul.addr %s21, 128
          %s413 = scalar_lea.hbm %s3, %s412
          %s415 = sshll.u32 %s405, 4
          %s416 = int_to_ptr.vmem [resolvable:$true] %s415
          %418 = dma.vmem_to_hbm [thread:$0]  %s416, 128, %s413, %s402
        $region48: #{tpu_custom_call.1} parent=31 // pred_fallthru
          _
      $region32: #{tpu_custom_call.1} parent=5 // pred_fallthru
        _
      %p419 = scmp.le.s32.totalorder 2, %s16
      // Predicated region
      $region49: #{tpu_custom_call.1} parent=5 // pred_check
        %p420 = pneg %p419
      $region50: #{tpu_custom_call.1} parent=5 // pred_check_branch
        %422 = sbr.rel (%p420) target = $region52
      $region51: #{tpu_custom_call.1} parent=5 // pred_region
        %s423 = ssub.s32 %s16, 2
        // Predicated region
        $region53: #{tpu_custom_call.1} parent=51 // pred_check
          %p424 = pneg %p113
        $region54: #{tpu_custom_call.1} parent=51 // pred_check_branch
          %426 = sbr.rel (%p424) target = $region56
        $region55: #{tpu_custom_call.1} parent=51 // pred_region
          %s427 = sand.u32 %s98, 1
          %s428 = scalar_lea.sflag [#allocation4], %s427
          %s429 = sand.u32 %s98, 1
          %s430 = smul.addr %s429, 8
          %s431 = scalar_lea.vmem [#allocation8], %s430
          %432 = dma.done %s428, 128
        $region56: #{tpu_custom_call.1} parent=51 // pred_fallthru
          _
      $region52: #{tpu_custom_call.1} parent=5 // pred_fallthru
        _
    $region6: #{tpu_custom_call.1} parent=1 // loop_footer
      %s20 = sadd.s32 1, %s16
    $region7: #{tpu_custom_call.1} parent=1 // loop_footer_branch
      %15 = sbr.rel target = $region3
    $region8: #{tpu_custom_call.1} parent=1 // loop_exit
      _
    %433 = vsyncpa [#allocation3], 1
    %s434 = scalar_lea.sflag [#allocation3], 1
    %435 = vsyncpa %s434, 1
    %436 = vsyncpa [#allocation6], 1
    %437 = vsyncpa [#allocation4], 1
    %s438 = scalar_lea.sflag [#allocation4], 1
    %439 = vsyncpa %s438, 1

</llo_original>
